<compile_context>
chip_gen: v7x
topology: tpu7x:2x2x1
jax: 0.10.0
libtpu: 0.0.40
codegen_flags: <defaults>
</compile_context>

<pallas_src>
import functools

import numpy as np
import jax
import jax.numpy as jnp
from jax import lax
from jax.experimental import pallas as pl
from jax.experimental.pallas import tpu as pltpu

EPS_BN = 1e-5
EPS_COS = 1e-8
HEAD_PAD = 128                       # lane-dense width for the 2-wide fc heads


def _round_up(x, m):
    return (x + m - 1) // m * m


def _cdiv(a, b):
    return (a + b - 1) // b


@functools.lru_cache(maxsize=None)
def _vmem_limit_bytes():
    """Per-generation VMEM budget (~80% of physical) instead of a fixed 32MiB."""
    try:
        cap = int(pltpu.get_tpu_info().vmem_capacity_bytes)
    except Exception:
        cap = 64 * 1024 * 1024
    return max(32 * 1024 * 1024, int(cap * 0.8))


def _row_tiling(n, row_bytes, vmem_budget):
    """Row tile for Kernel A.  Small N runs as a single grid step (no per-step
    overhead to pay on single-TC v5e/v6e); large N uses the biggest tile that
    fits the VMEM budget (512-row tiles reach ~85% of HBM roofline vs ~29%
    at 128-row tiles)."""
    n8 = max(8, _round_up(n, 8))
    if n8 <= 512:
        # TODO(synk): on v7x (2 TCs) a 2-way split for 256<=N<512 could help.
        return n8, n8
    tn = 512
    while tn > 128 and 2 * tn * row_bytes > vmem_budget:   # x2: double buffering
        tn //= 2
    return _round_up(n8, tn), tn


def _entity_tiling(E, T, C, vmem_budget):
    """Entity-chunk tile for Kernel B.  Keep the chunk as large as the VMEM
    budget allows (fewer chunks => fewer serial GRU matmul launches on a
    single TC) but bounded so v7x's 64 MiB VMEM stays safe and pipelining
    works for large T*E."""
    e8 = max(8, _round_up(E, 8))
    # f32 bytes per entity resident per chunk: x (2x dbuf) + 3 gi + rnn + out (2x)
    per_entity = 4 * T * (2 * C + 3 * C + C + 2 * HEAD_PAD)
    cap = max(8, min(128, (vmem_budget // max(per_entity, 1)) // 8 * 8))
    n_chunks = _cdiv(e8, cap)
    tE = _round_up(_cdiv(e8, n_chunks), 8)
    return _round_up(e8, tE), tE


def _unroll_factor(T):
    for u in (4, 3, 2):
        if T >= u and T % u == 0:
            return u
    return 1


# ----------------------------------------------------------------------------
# Kernel A: fused embedding (Linear + folded BatchNorm) + cosine-sim scaling
#           + av_fusion Linear + ReLU + fc_a / fc_v heads (one lane-dense slab:
#           cols 0:2 = fc_a, cols 2:4 = fc_v).
# ----------------------------------------------------------------------------
def _embed_heads_kernel(af_ref, vf_ref, avf_ref, vvf_ref,
                        wa_ref, ba_ref, wv_ref, bv_ref,
                        wfa_ref, wfv_ref, bf_ref,
                        wha_ref, whv_ref, bh_ref,
                        gfeat_ref, heads_ref):
    mm = wa_ref.dtype    # matmul operand dtype (f32 or bf16); accumulate in f32
    a_emb = jnp.dot(af_ref[...].astype(mm), wa_ref[...],
                    preferred_element_type=jnp.float32) + ba_ref[...]
    v_emb = jnp.dot(vf_ref[...].astype(mm), wv_ref[...],
                    preferred_element_type=jnp.float32) + bv_ref[...]

    # cosine_similarity(audio_vf_emb, video_vf_emb) scales the audio embedding
    avf = avf_ref[...]
    vvf = vvf_ref[...]
    num = jnp.sum(avf * vvf, axis=1, keepdims=True)
    na = jnp.maximum(jnp.sqrt(jnp.sum(avf * avf, axis=1, keepdims=True)), EPS_COS)
    nv = jnp.maximum(jnp.sqrt(jnp.sum(vvf * vvf, axis=1, keepdims=True)), EPS_COS)
    a_emb = a_emb * (num / (na * nv))

    a_mm = a_emb.astype(mm)
    v_mm = v_emb.astype(mm)
    # av_fusion(cat([a_emb, v_emb])) == a_emb @ Wf[:C] + v_emb @ Wf[C:], + ReLU
    g = (jnp.dot(a_mm, wfa_ref[...], preferred_element_type=jnp.float32)
         + jnp.dot(v_mm, wfv_ref[...], preferred_element_type=jnp.float32)
         + bf_ref[...])
    gfeat_ref[...] = jnp.maximum(g, 0.0)

    # fused fc_a / fc_v heads, packed lane-dense (cols 0:2 = fc_a, 2:4 = fc_v)
    heads_ref[...] = (jnp.dot(a_mm, wha_ref[...], preferred_element_type=jnp.float32)
                      + jnp.dot(v_mm, whv_ref[...], preferred_element_type=jnp.float32)
                      + bh_ref[...])


def embed_heads_forward(audio_feats, video_feats, a_vf, v_vf, pk):
    N = audio_feats.shape[0]
    C = pk["wa"].shape[1]
    row_bytes = 4 * (audio_feats.shape[1] + video_feats.shape[1]
                     + a_vf.shape[1] + v_vf.shape[1] + C + HEAD_PAD)
    n_pad, tn = _row_tiling(N, row_bytes, _vmem_limit_bytes() // 2)

    def pad_rows(a):
        return a if n_pad == N else jnp.pad(a, ((0, n_pad - N), (0, 0)))

    af, vf, avf, vvf = (pad_rows(a) for a in (audio_feats, video_feats, a_vf, v_vf))
    weights = [pk["wa"], pk["ba"], pk["wv"], pk["bv"],
               pk["wf_a"], pk["wf_v"], pk["bf"],
               pk["wh_a"], pk["wh_v"], pk["bh"]]

    row = lambda a: pl.BlockSpec((tn, a.shape[1]), lambda i: (i, 0))
    full = lambda a: pl.BlockSpec(a.shape, lambda i: (0,) * a.ndim)

    gfeat, heads = pl.pallas_call(
        _embed_heads_kernel,
        out_shape=(jax.ShapeDtypeStruct((n_pad, C), jnp.float32),
                   jax.ShapeDtypeStruct((n_pad, HEAD_PAD), jnp.float32)),
        grid_spec=pltpu.PrefetchScalarGridSpec(
            num_scalar_prefetch=0,
            grid=(n_pad // tn,),
            in_specs=[row(af), row(vf), row(avf), row(vvf)]
                     + [full(w) for w in weights],
            out_specs=[pl.BlockSpec((tn, C), lambda i: (i, 0)),
                       pl.BlockSpec((tn, HEAD_PAD), lambda i: (i, 0))]),
        compiler_params=pltpu.CompilerParams(
            dimension_semantics=("parallel",),
            vmem_limit_bytes=_vmem_limit_bytes()),
    )(af, vf, avf, vvf, *weights)
    return gfeat[:N], heads[:N]


# ----------------------------------------------------------------------------
# Kernel B: 2-layer GRU + fc, gridded over entity chunks.  The layer-1 input
# projection is hoisted out of the recurrence; h1/h2 are fori_loop carries.
# ----------------------------------------------------------------------------
def _gru_fc_kernel(x_ref,
                   wih1_ref, bih1_ref, whh1_ref, bhh1_ref,
                   w2rz_ref, b2rz_ref, wih2n_ref, bih2n_ref,
                   whh2n_ref, bhh2n_ref, wfc_ref, bfc_ref,
                   out_ref,
                   gi_r_ref, gi_z_ref, gi_n_ref, rnn_ref,
                   *, T, tE, C, lane_aligned, unroll):
    # ---- hoisted layer-1 input projection over all T*tE rows ---------------
    x2d = x_ref[...].reshape(T * tE, C).astype(wih1_ref.dtype)
    if lane_aligned:
        gi = (jnp.dot(x2d, wih1_ref[...], preferred_element_type=jnp.float32)
              + bih1_ref[...])
        gi_r_ref[...] = gi[:, :C].reshape(T, tE, C)
        gi_z_ref[...] = gi[:, C:2 * C].reshape(T, tE, C)
        gi_n_ref[...] = gi[:, 2 * C:].reshape(T, tE, C)
    else:
        # C not a multiple of 128: compute per gate so the in-loop reads are
        # contiguous [tE, C] tiles (no sub-128 lane slicing on the hot path).
        for g, gref in enumerate((gi_r_ref, gi_z_ref, gi_n_ref)):
            gref[...] = (jnp.dot(x2d, wih1_ref[g],
                                 preferred_element_type=jnp.float32)
                         + bih1_ref[g]).reshape(T, tE, C)

    # ---- serial recurrence: h1 / h2 are loop-carried vreg values (f32) -----
    def step(t, carry):
        h1, h2 = carry
        # layer 1 recurrent part
        if lane_aligned:
            gh = (jnp.dot(h1, whh1_ref[...], preferred_element_type=jnp.float32)
                  + bhh1_ref[...])
            gh_r, gh_z, gh_n = gh[:, :C], gh[:, C:2 * C], gh[:, 2 * C:]
        else:
            gh_r = jnp.dot(h1, whh1_ref[0], preferred_element_type=jnp.float32) + bhh1_ref[0]
            gh_z = jnp.dot(h1, whh1_ref[1], preferred_element_type=jnp.float32) + bhh1_ref[1]
            gh_n = jnp.dot(h1, whh1_ref[2], preferred_element_type=jnp.float32) + bhh1_ref[2]
        r1 = jax.nn.sigmoid(gi_r_ref[t] + gh_r)
        z1 = jax.nn.sigmoid(gi_z_ref[t] + gh_z)
        n1 = jnp.tanh(gi_n_ref[t] + r1 * gh_n)
        h1n = (1.0 - z1) * n1 + z1 * h1

        # layer 2: r/z from one merged [h1n | h2] matmul; the n gate keeps its
        # input/recurrent halves separate (r2 only gates the recurrent one).
        # TODO(synk): nn.GRU inter-layer dropout(0.2) is train-only; eval -> identity.
        x2 = jnp.concatenate([h1n, h2], axis=1)            # [tE, 2C]
        if lane_aligned:
            rz = (jnp.dot(x2, w2rz_ref[...], preferred_element_type=jnp.float32)
                  + b2rz_ref[...])
            r2 = jax.nn.sigmoid(rz[:, :C])
            z2 = jax.nn.sigmoid(rz[:, C:])
        else:
            r2 = jax.nn.sigmoid(
                jnp.dot(x2, w2rz_ref[0], preferred_element_type=jnp.float32) + b2rz_ref[0])
            z2 = jax.nn.sigmoid(
                jnp.dot(x2, w2rz_ref[1], preferred_element_type=jnp.float32) + b2rz_ref[1])
        i2n = jnp.dot(h1n, wih2n_ref[...], preferred_element_type=jnp.float32) + bih2n_ref[...]
        g2n = jnp.dot(h2, whh2n_ref[...], preferred_element_type=jnp.float32) + bhh2n_ref[...]
        n2 = jnp.tanh(i2n + r2 * g2n)
        h2n = (1.0 - z2) * n2 + z2 * h2

        rnn_ref[t] = h2n
        return h1n, h2n

    h0 = jnp.zeros((tE, C), jnp.float32)
    lax.fori_loop(0, T, step, (h0, h0), unroll=unroll)

    # ---- fused fc head over the whole chunk (lane-dense 128-wide output) ---
    # TODO(synk): only 2 of the 128 output lanes are consumed downstream; a
    # packed writeback would cut HBM writeback further.
    rnn2d = rnn_ref[...].reshape(T * tE, C).astype(wfc_ref.dtype)
    out = jnp.dot(rnn2d, wfc_ref[...], preferred_element_type=jnp.float32) + bfc_ref[...]
    out_ref[...] = out.reshape(T, tE, HEAD_PAD)


def gru_fc_forward(x_packed, pk, tE):
    T, E_pad, C = x_packed.shape
    assert E_pad % tE == 0
    lane_aligned = bool(pk["lane_aligned"])
    weights = [pk["wih1"], pk["bih1"], pk["whh1"], pk["bhh1"],
               pk["w2_rz"], pk["b2_rz"], pk["wih2_n"], pk["bih2_n"],
               pk["whh2_n"], pk["bhh2_n"], pk["wfc"], pk["bfc"]]
    full = lambda a: pl.BlockSpec(a.shape, lambda i: (0,) * a.ndim)
    kernel = functools.partial(_gru_fc_kernel, T=T, tE=tE, C=C,
                               lane_aligned=lane_aligned,
                               unroll=_unroll_factor(T))
    return pl.pallas_call(
        kernel,
        out_shape=jax.ShapeDtypeStruct((T, E_pad, HEAD_PAD), jnp.float32),
        grid_spec=pltpu.PrefetchScalarGridSpec(
            num_scalar_prefetch=0,
            grid=(E_pad // tE,),
            in_specs=[pl.BlockSpec((T, tE, C), lambda i: (0, i, 0))]
                     + [full(w) for w in weights],
            out_specs=pl.BlockSpec((T, tE, HEAD_PAD), lambda i: (0, i, 0)),
            scratch_shapes=[pltpu.VMEM((T, tE, C), jnp.float32),    # gi_r
                            pltpu.VMEM((T, tE, C), jnp.float32),    # gi_z
                            pltpu.VMEM((T, tE, C), jnp.float32),    # gi_n
                            pltpu.VMEM((T, tE, C), jnp.float32)]),  # rnn out
        compiler_params=pltpu.CompilerParams(
            # TODO(synk): on v7x (2 TCs) pltpu.CORE_PARALLEL would split the
            # independent entity chunks across cores.
            dimension_semantics=("parallel",),
            vmem_limit_bytes=_vmem_limit_bytes()),
    )(x_packed, *weights)


# ----------------------------------------------------------------------------
# Trace-time parameter preparation: fold BatchNorm, build path-dependent GRU
# weight layouts, pad the 2-wide heads to 128 lanes, optional bf16 cast of the
# non-recurrent matmul weights.
# ----------------------------------------------------------------------------
def prepare_params(p, C, matmul_dtype=jnp.float32):
    f32 = jnp.float32
    lane_aligned = (C % 128 == 0)

    def fold_bn(w, b, gamma, beta, mean, var):
        s = gamma / jnp.sqrt(var + EPS_BN)
        return w * s, (b - mean) * s + beta

    def mm(w):
        return w.astype(matmul_dtype)

    wa, ba = fold_bn(p["w_a"], p["b_a"], p["bn_a_g"], p["bn_a_b"],
                     p["bn_a_m"], p["bn_a_v"])
    wv, bv = fold_bn(p["w_v"], p["b_v"], p["bn_v_g"], p["bn_v_b"],
                     p["bn_v_m"], p["bn_v_v"])

    wh_a = jnp.zeros((C, HEAD_PAD), f32).at[:, 0:2].set(p["w_fc_a"])
    wh_v = jnp.zeros((C, HEAD_PAD), f32).at[:, 2:4].set(p["w_fc_v"])
    bh = (jnp.zeros((1, HEAD_PAD), f32)
          .at[:, 0:2].set(p["b_fc_a"]).at[:, 2:4].set(p["b_fc_v"]))
    wfc = jnp.zeros((C, HEAD_PAD), f32).at[:, 0:2].set(p["w_fc"])
    bfc = jnp.zeros((1, HEAD_PAD), f32).at[:, 0:2].set(p["b_fc"])

    wih1, bih1 = p["gru_wih1"], p["gru_bih1"]
    whh1, bhh1 = p["gru_whh1"], p["gru_bhh1"]
    wih2, bih2 = p["gru_wih2"], p["gru_bih2"]
    whh2, bhh2 = p["gru_whh2"], p["gru_bhh2"]

    def split_w(w):   # [C, 3C] -> [3, C, C]  (gate order r, z, n)
        return jnp.stack([w[:, :C], w[:, C:2 * C], w[:, 2 * C:]], axis=0)

    def split_b(b):   # [1, 3C] -> [3, 1, C]
        return jnp.stack([b[:, :C], b[:, C:2 * C], b[:, 2 * C:]], axis=0)

    pk = dict(
        lane_aligned=lane_aligned,
        # Kernel A weights (bf16-castable); biases stay f32
        wa=mm(wa), ba=ba, wv=mm(wv), bv=bv,
        wf_a=mm(p["w_f"][:C, :]), wf_v=mm(p["w_f"][C:, :]), bf=p["b_f"],
        wh_a=mm(wh_a), wh_v=mm(wh_v), bh=bh,
        # Kernel B: hoisted input projection + fc may use bf16 operands; the
        # recurrence weights stay f32 (accuracy over T steps).
        wfc=mm(wfc), bfc=bfc,
        wih2_n=wih2[:, 2 * C:], bih2_n=bih2[:, 2 * C:],
        whh2_n=whh2[:, 2 * C:], bhh2_n=bhh2[:, 2 * C:])

    if lane_aligned:
        pk["wih1"], pk["bih1"] = mm(wih1), bih1            # [C,3C] / [1,3C]
        pk["whh1"], pk["bhh1"] = whh1, bhh1
        pk["w2_rz"] = jnp.concatenate([wih2[:, :2 * C], whh2[:, :2 * C]], axis=0)
        pk["b2_rz"] = bih2[:, :2 * C] + bhh2[:, :2 * C]
    else:
        pk["wih1"], pk["bih1"] = mm(split_w(wih1)), split_b(bih1)
        pk["whh1"], pk["bhh1"] = split_w(whh1), split_b(bhh1)
        pk["w2_rz"] = jnp.stack(
            [jnp.concatenate([wih2[:, :C], whh2[:, :C]], axis=0),
             jnp.concatenate([wih2[:, C:2 * C], whh2[:, C:2 * C]], axis=0)], axis=0)
        pk["b2_rz"] = jnp.stack([bih2[:, :C] + bhh2[:, :C],
                                 bih2[:, C:2 * C] + bhh2[:, C:2 * C]], axis=0)
    return pk


# ----------------------------------------------------------------------------
# Glue: entity grouping (data-dependent Python control flow in the PyTorch
# forward) is resolved statically with numpy at trace time.
# TODO(synk): entities / audio_node_mask must be static host values; traced
# device arrays for these would need an in-kernel DMA gather instead.
# ----------------------------------------------------------------------------
def _entity_packing(entities):
    ents = [int(e) for e in np.asarray(entities).tolist()]
    uniq = list(dict.fromkeys(ents))
    ent_idx = np.array([uniq.index(e) for e in ents], dtype=np.int32)
    pos_idx = np.zeros(len(ents), dtype=np.int32)
    counts = {}
    for i, e in enumerate(ents):
        pos_idx[i] = counts.get(e, 0)
        counts[e] = counts.get(e, 0) + 1
    return ent_idx, pos_idx, len(uniq), int(max(counts.values()))


def graph_rnn_forward(x, entities, audio_node_mask, p, in_a, in_v, in_vf,
                      matmul_dtype=jnp.float32, entity_tile=None):
    C = p["w_a"].shape[1]
    pk = prepare_params(p, C, matmul_dtype)

    audio_feats = x[:, 0, :in_a]
    video_feats = x[:, 1, :in_v]
    a_vf = x[:, 2, :in_vf]
    v_vf = x[:, 3, :in_vf]

    graph_feats, av_heads = embed_heads_forward(
        audio_feats, video_feats, a_vf, v_vf, pk)

    ent_idx, pos_idx, E, T = _entity_packing(entities)
    if entity_tile is None:
        E_pad, tE = _entity_tiling(E, T, C, _vmem_limit_bytes() // 2)
    else:
        tE = max(8, _round_up(int(entity_tile), 8))
        E_pad = _round_up(max(E, tE), tE)

    # pack nodes into per-entity sequences, time-major [T, E_pad, C]
    # TODO(synk): this scatter (and the gather below) are XLA ops between the
    # two kernels; a scalar-prefetch gather inside Kernel B would remove the
    # extra HBM round trip of graph_feats.
    rnn_x = jnp.zeros((T, E_pad, C), jnp.float32).at[pos_idx, ent_idx].set(graph_feats)
    fc_all = gru_fc_forward(rnn_x, pk, tE)                 # [T, E_pad, 128]
    out = fc_all[pos_idx, ent_idx][:, 0:2]                 # fc(graph_feats_out)

    amask = np.asarray(audio_node_mask, dtype=bool)
    audio_idx = np.nonzero(amask)[0]
    video_idx = np.nonzero(~amask)[0]
    audio_out = av_heads[audio_idx][:, 0:2]
    video_out = av_heads[video_idx][:, 2:4]
    return out, audio_out, video_out


# ----------------------------------------------------------------------------
# Pure-JAX reference (unfolded params, matches PyTorch eval semantics).
# ----------------------------------------------------------------------------
def reference_forward(x, entities, audio_node_mask, p, in_a, in_v, in_vf):
    af = x[:, 0, :in_a]
    vf = x[:, 1, :in_v]
    avf = x[:, 2, :in_vf]
    vvf = x[:, 3, :in_vf]
    a_emb = ((af @ p["w_a"] + p["b_a"] - p["bn_a_m"])
             / jnp.sqrt(p["bn_a_v"] + EPS_BN) * p["bn_a_g"] + p["bn_a_b"])
    v_emb = ((vf @ p["w_v"] + p["b_v"] - p["bn_v_m"])
             / jnp.sqrt(p["bn_v_v"] + EPS_BN) * p["bn_v_g"] + p["bn_v_b"])
    dot = jnp.sum(avf * vvf, axis=1, keepdims=True)
    na = jnp.maximum(jnp.sqrt(jnp.sum(avf * avf, axis=1, keepdims=True)), EPS_COS)
    nv = jnp.maximum(jnp.sqrt(jnp.sum(vvf * vvf, axis=1, keepdims=True)), EPS_COS)
    a_emb = a_emb * (dot / (na * nv))
    g = jnp.maximum(jnp.concatenate([a_emb, v_emb], axis=1) @ p["w_f"] + p["b_f"], 0.0)

    ent_idx, pos_idx, E, T = _entity_packing(entities)
    C = g.shape[1]
    rnn_x = jnp.zeros((T, E, C), jnp.float32).at[pos_idx, ent_idx].set(g)

    def cell(xt, h, wih, whh, bih, bhh):
        gi = xt @ wih + bih
        gh = h @ whh + bhh
        r = jax.nn.sigmoid(gi[:, :C] + gh[:, :C])
        z = jax.nn.sigmoid(gi[:, C:2 * C] + gh[:, C:2 * C])
        n = jnp.tanh(gi[:, 2 * C:] + r * gh[:, 2 * C:])
        return (1.0 - z) * n + z * h

    h1 = jnp.zeros((E, C), jnp.float32)
    h2 = jnp.zeros((E, C), jnp.float32)
    outs = []
    for t in range(T):
        h1 = cell(rnn_x[t], h1, p["gru_wih1"], p["gru_whh1"],
                  p["gru_bih1"], p["gru_bhh1"])
        h2 = cell(h1, h2, p["gru_wih2"], p["gru_whh2"],
                  p["gru_bih2"], p["gru_bhh2"])
        outs.append(h2)
    rnn_out = jnp.stack(outs, axis=0)
    g_out = rnn_out[pos_idx, ent_idx]

    out = g_out @ p["w_fc"] + p["b_fc"]
    amask = np.asarray(audio_node_mask, dtype=bool)
    a_out = (a_emb @ p["w_fc_a"] + p["b_fc_a"])[np.nonzero(amask)[0]]
    v_out = (v_emb @ p["w_fc_v"] + p["b_fc_v"])[np.nonzero(~amask)[0]]
    return out, a_out, v_out


# ----------------------------------------------------------------------------
# Deterministic parameter init (shapes follow the module __init__).
# ----------------------------------------------------------------------------
def init_params(key, in_a, in_v, C):
    ks = jax.random.split(key, 20)

    def lin(k, fan_in, fan_out):
        k1, k2 = jax.random.split(k)
        bound = 1.0 / np.sqrt(fan_in)
        w = jax.random.uniform(k1, (fan_in, fan_out), jnp.float32, -bound, bound)
        b = jax.random.uniform(k2, (1, fan_out), jnp.float32, -bound, bound)
        return w, b

    p = {}
    p["w_a"], p["b_a"] = lin(ks[0], in_a, C)            # layer_0_a
    p["w_v"], p["b_v"] = lin(ks[1], in_v, C)            # layer_0_v
    p["w_f"], p["b_f"] = lin(ks[2], 2 * C, C)           # av_fusion
    p["bn_a_g"] = 1.0 + 0.1 * jax.random.normal(ks[3], (1, C), jnp.float32)
    p["bn_a_b"] = 0.1 * jax.random.normal(ks[4], (1, C), jnp.float32)
    p["bn_a_m"] = 0.1 * jax.random.normal(ks[5], (1, C), jnp.float32)
    p["bn_a_v"] = jax.random.uniform(ks[6], (1, C), jnp.float32, 0.5, 1.5)
    p["bn_v_g"] = 1.0 + 0.1 * jax.random.normal(ks[7], (1, C), jnp.float32)
    p["bn_v_b"] = 0.1 * jax.random.normal(ks[8], (1, C), jnp.float32)
    p["bn_v_m"] = 0.1 * jax.random.normal(ks[9], (1, C), jnp.float32)
    p["bn_v_v"] = jax.random.uniform(ks[10], (1, C), jnp.float32, 0.5, 1.5)
    # 2-layer GRU (gate order r,z,n; weights stored transposed [in, 3C])
    p["gru_wih1"], p["gru_bih1"] = lin(ks[11], C, 3 * C)
    p["gru_whh1"], p["gru_bhh1"] = lin(ks[12], C, 3 * C)
    p["gru_wih2"], p["gru_bih2"] = lin(ks[13], C, 3 * C)
    p["gru_whh2"], p["gru_bhh2"] = lin(ks[14], C, 3 * C)
    # heads
    p["w_fc"], p["b_fc"] = lin(ks[15], C, 2)
    p["w_fc_a"], p["b_fc_a"] = lin(ks[16], C, 2)
    p["w_fc_v"], p["b_fc_v"] = lin(ks[17], C, 2)
    return p


def _run_case(name, x, entities, audio_node_mask, params, in_a, in_v, in_vf,
              matmul_dtype, tol, entity_tile=None):
    out = graph_rnn_forward(x, entities, audio_node_mask, params,
                            in_a, in_v, in_vf,
                            matmul_dtype=matmul_dtype, entity_tile=entity_tile)
    jax.block_until_ready(out)
    ref = reference_forward(x, entities, audio_node_mask, params, in_a, in_v, in_vf)
    for got, want in zip(out, ref):
        np.testing.assert_allclose(np.asarray(got), np.asarray(want),
                                   rtol=tol, atol=tol, err_msg=name)


if __name__ == "__main__":
    key = jax.random.PRNGKey(0)
    k1, k2, k3, k4 = jax.random.split(key, 4)

    # Case 1: C=32 (per-gate GRU path), f32 matmuls; tight parity with the
    # pure-JAX reference of the PyTorch eval-mode forward.
    N1, IN1, C1 = 16, 16, 32
    x1 = jax.random.normal(k1, (N1, 4, IN1), jnp.float32)
    ents1 = np.array([0, 0, 0, 0, 1, 1, 1, 1, 1, 1, 2, 2, 2, 2, 2, 2], np.int32)
    mask1 = [bool(i % 2 == 0) for i in range(N1)]
    p1 = init_params(k2, IN1, IN1, C1)
    _run_case("c32_f32", x1, ents1, mask1, p1, IN1, IN1, IN1,
              jnp.float32, tol=1e-3)

    # Case 2: C=128 (lane-aligned fused-gate path), bf16 matmul operands,
    # multiple entity chunks (entity_tile=8 -> 2 grid steps).  The looser
    # tolerance only reflects bf16 operand rounding; case 1 pins structure.
    N2, IN2, C2 = 40, 64, 128
    x2 = jax.random.normal(k3, (N2, 4, IN2), jnp.float32)
    ents2 = np.repeat(np.arange(10, dtype=np.int32), 4)
    mask2 = [bool(i % 2 == 0) for i in range(N2)]
    p2 = init_params(k4, IN2, IN2, C2)
    _run_case("c128_bf16", x2, ents2, mask2, p2, IN2, IN2, IN2,
              jnp.bfloat16, tol=5e-2, entity_tile=8)

    print("KERNEL_OK")
</pallas_src>

<mosaic_0001>
module attributes {stable_mosaic.version = 11 : i64} {
  func.func @_embed_heads_kernel(%arg0: i32, %arg1: memref<16x16xf32, #tpu.memory_space<vmem>>, %arg2: memref<16x16xf32, #tpu.memory_space<vmem>>, %arg3: memref<16x16xf32, #tpu.memory_space<vmem>>, %arg4: memref<16x16xf32, #tpu.memory_space<vmem>>, %arg5: memref<16x32xf32, #tpu.memory_space<vmem>>, %arg6: memref<1x32xf32, #tpu.memory_space<vmem>>, %arg7: memref<16x32xf32, #tpu.memory_space<vmem>>, %arg8: memref<1x32xf32, #tpu.memory_space<vmem>>, %arg9: memref<32x32xf32, #tpu.memory_space<vmem>>, %arg10: memref<32x32xf32, #tpu.memory_space<vmem>>, %arg11: memref<1x32xf32, #tpu.memory_space<vmem>>, %arg12: memref<32x128xf32, #tpu.memory_space<vmem>>, %arg13: memref<32x128xf32, #tpu.memory_space<vmem>>, %arg14: memref<1x128xf32, #tpu.memory_space<vmem>>, %arg15: memref<16x32xf32, #tpu.memory_space<vmem>>, %arg16: memref<16x128xf32, #tpu.memory_space<vmem>>) attributes {dimension_semantics = [#tpu.dimension_semantics<parallel>], iteration_bounds = array<i64: 1>, scalar_prefetch = 0 : i64, scratch_operands = 0 : i64, tpu.core_type = #tpu.core_type<tc>, window_params = [{transform_indices = @transform_0, window_bounds = array<i64: 16, 16>}, {transform_indices = @transform_1, window_bounds = array<i64: 16, 16>}, {transform_indices = @transform_2, window_bounds = array<i64: 16, 16>}, {transform_indices = @transform_3, window_bounds = array<i64: 16, 16>}, {pipeline_mode = #tpu.pipeline_mode<synchronous>, transform_indices = @transform_4, window_bounds = array<i64: 16, 32>}, {pipeline_mode = #tpu.pipeline_mode<synchronous>, transform_indices = @transform_5, window_bounds = array<i64: 1, 32>}, {pipeline_mode = #tpu.pipeline_mode<synchronous>, transform_indices = @transform_6, window_bounds = array<i64: 16, 32>}, {pipeline_mode = #tpu.pipeline_mode<synchronous>, transform_indices = @transform_7, window_bounds = array<i64: 1, 32>}, {pipeline_mode = #tpu.pipeline_mode<synchronous>, transform_indices = @transform_8, window_bounds = array<i64: 32, 32>}, {pipeline_mode = #tpu.pipeline_mode<synchronous>, transform_indices = @transform_9, window_bounds = array<i64: 32, 32>}, {pipeline_mode = #tpu.pipeline_mode<synchronous>, transform_indices = @transform_10, window_bounds = array<i64: 1, 32>}, {pipeline_mode = #tpu.pipeline_mode<synchronous>, transform_indices = @transform_11, window_bounds = array<i64: 32, 128>}, {pipeline_mode = #tpu.pipeline_mode<synchronous>, transform_indices = @transform_12, window_bounds = array<i64: 32, 128>}, {pipeline_mode = #tpu.pipeline_mode<synchronous>, transform_indices = @transform_13, window_bounds = array<i64: 1, 128>}, {transform_indices = @transform_14, window_bounds = array<i64: 16, 32>}, {transform_indices = @transform_15, window_bounds = array<i64: 16, 128>}]} {
    %c0 = arith.constant 0 : index
    %c0_0 = arith.constant 0 : index
    %0 = vector.load %arg1[%c0, %c0_0] : memref<16x16xf32, #tpu.memory_space<vmem>>, vector<16x16xf32>
    %c0_1 = arith.constant 0 : index
    %c0_2 = arith.constant 0 : index
    %1 = vector.load %arg5[%c0_1, %c0_2] : memref<16x32xf32, #tpu.memory_space<vmem>>, vector<16x32xf32>
    %cst = arith.constant dense<0.000000e+00> : vector<16x32xf32>
    %2 = tpu.matmul %0, %1, %cst {dimension_numbers = #tpu.dot_dimension_numbers<[1], [0], [0], [1], [0, 0, 1, 1], [], []>} : vector<16x16xf32>, vector<16x32xf32>, vector<16x32xf32> -> vector<16x32xf32>
    %c0_3 = arith.constant 0 : index
    %c0_4 = arith.constant 0 : index
    %3 = vector.load %arg6[%c0_3, %c0_4] : memref<1x32xf32, #tpu.memory_space<vmem>>, vector<1x32xf32>
    %4 = vector.broadcast %3 : vector<1x32xf32> to vector<16x32xf32>
    %5 = arith.addf %2, %4 : vector<16x32xf32>
    %c0_5 = arith.constant 0 : index
    %c0_6 = arith.constant 0 : index
    %6 = vector.load %arg2[%c0_5, %c0_6] : memref<16x16xf32, #tpu.memory_space<vmem>>, vector<16x16xf32>
    %c0_7 = arith.constant 0 : index
    %c0_8 = arith.constant 0 : index
    %7 = vector.load %arg7[%c0_7, %c0_8] : memref<16x32xf32, #tpu.memory_space<vmem>>, vector<16x32xf32>
    %cst_9 = arith.constant dense<0.000000e+00> : vector<16x32xf32>
    %8 = tpu.matmul %6, %7, %cst_9 {dimension_numbers = #tpu.dot_dimension_numbers<[1], [0], [0], [1], [0, 0, 1, 1], [], []>} : vector<16x16xf32>, vector<16x32xf32>, vector<16x32xf32> -> vector<16x32xf32>
    %c0_10 = arith.constant 0 : index
    %c0_11 = arith.constant 0 : index
    %9 = vector.load %arg8[%c0_10, %c0_11] : memref<1x32xf32, #tpu.memory_space<vmem>>, vector<1x32xf32>
    %10 = vector.broadcast %9 : vector<1x32xf32> to vector<16x32xf32>
    %11 = arith.addf %8, %10 : vector<16x32xf32>
    %c0_12 = arith.constant 0 : index
    %c0_13 = arith.constant 0 : index
    %12 = vector.load %arg3[%c0_12, %c0_13] : memref<16x16xf32, #tpu.memory_space<vmem>>, vector<16x16xf32>
    %c0_14 = arith.constant 0 : index
    %c0_15 = arith.constant 0 : index
    %13 = vector.load %arg4[%c0_14, %c0_15] : memref<16x16xf32, #tpu.memory_space<vmem>>, vector<16x16xf32>
    %14 = arith.mulf %12, %13 : vector<16x16xf32>
    %cst_16 = arith.constant dense<0.000000e+00> : vector<16xf32>
    %15 = vector.multi_reduction <add>, %14, %cst_16 [1] : vector<16x16xf32> to vector<16xf32>
    %16 = vector.shape_cast %15 : vector<16xf32> to vector<16x1xf32>
    %17 = arith.mulf %12, %12 : vector<16x16xf32>
    %cst_17 = arith.constant dense<0.000000e+00> : vector<16xf32>
    %18 = vector.multi_reduction <add>, %17, %cst_17 [1] : vector<16x16xf32> to vector<16xf32>
    %19 = vector.shape_cast %18 : vector<16xf32> to vector<16x1xf32>
    %20 = math.sqrt %19 : vector<16x1xf32>
    %cst_18 = arith.constant 9.99999993E-9 : f32
    %21 = vector.broadcast %cst_18 : f32 to vector<16x1xf32>
    %22 = arith.maximumf %20, %21 : vector<16x1xf32>
    %23 = arith.mulf %13, %13 : vector<16x16xf32>
    %cst_19 = arith.constant dense<0.000000e+00> : vector<16xf32>
    %24 = vector.multi_reduction <add>, %23, %cst_19 [1] : vector<16x16xf32> to vector<16xf32>
    %25 = vector.shape_cast %24 : vector<16xf32> to vector<16x1xf32>
    %26 = math.sqrt %25 : vector<16x1xf32>
    %cst_20 = arith.constant 9.99999993E-9 : f32
    %27 = vector.broadcast %cst_20 : f32 to vector<16x1xf32>
    %28 = arith.maximumf %26, %27 : vector<16x1xf32>
    %29 = arith.mulf %22, %28 : vector<16x1xf32>
    %30 = arith.divf %16, %29 : vector<16x1xf32>
    %31 = vector.broadcast %30 : vector<16x1xf32> to vector<16x32xf32>
    %32 = arith.mulf %5, %31 : vector<16x32xf32>
    %c0_21 = arith.constant 0 : index
    %c0_22 = arith.constant 0 : index
    %33 = vector.load %arg9[%c0_21, %c0_22] : memref<32x32xf32, #tpu.memory_space<vmem>>, vector<32x32xf32>
    %cst_23 = arith.constant dense<0.000000e+00> : vector<16x32xf32>
    %34 = tpu.matmul %32, %33, %cst_23 {dimension_numbers = #tpu.dot_dimension_numbers<[1], [0], [0], [1], [0, 0, 1, 1], [], []>} : vector<16x32xf32>, vector<32x32xf32>, vector<16x32xf32> -> vector<16x32xf32>
    %c0_24 = arith.constant 0 : index
    %c0_25 = arith.constant 0 : index
    %35 = vector.load %arg10[%c0_24, %c0_25] : memref<32x32xf32, #tpu.memory_space<vmem>>, vector<32x32xf32>
    %cst_26 = arith.constant dense<0.000000e+00> : vector<16x32xf32>
    %36 = tpu.matmul %11, %35, %cst_26 {dimension_numbers = #tpu.dot_dimension_numbers<[1], [0], [0], [1], [0, 0, 1, 1], [], []>} : vector<16x32xf32>, vector<32x32xf32>, vector<16x32xf32> -> vector<16x32xf32>
    %37 = arith.addf %34, %36 : vector<16x32xf32>
    %c0_27 = arith.constant 0 : index
    %c0_28 = arith.constant 0 : index
    %38 = vector.load %arg11[%c0_27, %c0_28] : memref<1x32xf32, #tpu.memory_space<vmem>>, vector<1x32xf32>
    %39 = vector.broadcast %38 : vector<1x32xf32> to vector<16x32xf32>
    %40 = arith.addf %37, %39 : vector<16x32xf32>
    %cst_29 = arith.constant 0.000000e+00 : f32
    %41 = vector.broadcast %cst_29 : f32 to vector<16x32xf32>
    %42 = arith.maximumf %40, %41 : vector<16x32xf32>
    %c0_30 = arith.constant 0 : index
    %c0_31 = arith.constant 0 : index
    %43 = vector.load %arg15[%c0_30, %c0_31] : memref<16x32xf32, #tpu.memory_space<vmem>>, vector<16x32xf32>
    tpu.vector_store %arg15[%c0_30, %c0_31], %42 {strides = array<i32>} : memref<16x32xf32, #tpu.memory_space<vmem>>, vector<16x32xf32>,
    %c0_32 = arith.constant 0 : index
    %c0_33 = arith.constant 0 : index
    %44 = vector.load %arg12[%c0_32, %c0_33] : memref<32x128xf32, #tpu.memory_space<vmem>>, vector<32x128xf32>
    %cst_34 = arith.constant dense<0.000000e+00> : vector<16x128xf32>
    %45 = tpu.matmul %32, %44, %cst_34 {dimension_numbers = #tpu.dot_dimension_numbers<[1], [0], [0], [1], [0, 0, 1, 1], [], []>} : vector<16x32xf32>, vector<32x128xf32>, vector<16x128xf32> -> vector<16x128xf32>
    %c0_35 = arith.constant 0 : index
    %c0_36 = arith.constant 0 : index
    %46 = vector.load %arg13[%c0_35, %c0_36] : memref<32x128xf32, #tpu.memory_space<vmem>>, vector<32x128xf32>
    %cst_37 = arith.constant dense<0.000000e+00> : vector<16x128xf32>
    %47 = tpu.matmul %11, %46, %cst_37 {dimension_numbers = #tpu.dot_dimension_numbers<[1], [0], [0], [1], [0, 0, 1, 1], [], []>} : vector<16x32xf32>, vector<32x128xf32>, vector<16x128xf32> -> vector<16x128xf32>
    %48 = arith.addf %45, %47 : vector<16x128xf32>
    %c0_38 = arith.constant 0 : index
    %c0_39 = arith.constant 0 : index
    %49 = vector.load %arg14[%c0_38, %c0_39] : memref<1x128xf32, #tpu.memory_space<vmem>>, vector<1x128xf32>
    %50 = vector.broadcast %49 : vector<1x128xf32> to vector<16x128xf32>
    %51 = arith.addf %48, %50 : vector<16x128xf32>
    %c0_40 = arith.constant 0 : index
    %c0_41 = arith.constant 0 : index
    %52 = vector.load %arg16[%c0_40, %c0_41] : memref<16x128xf32, #tpu.memory_space<vmem>>, vector<16x128xf32>
    tpu.vector_store %arg16[%c0_40, %c0_41], %51 {strides = array<i32>} : memref<16x128xf32, #tpu.memory_space<vmem>>, vector<16x128xf32>,
    return
  }
  func.func @transform_0(%arg0: i32) -> (i32, i32) {
    %c0_i32 = arith.constant 0 : i32
    %c0_i32_0 = arith.constant 0 : i32
    return %arg0, %c0_i32 : i32, i32
  }
  func.func @transform_1(%arg0: i32) -> (i32, i32) {
    %c0_i32 = arith.constant 0 : i32
    %c0_i32_0 = arith.constant 0 : i32
    return %arg0, %c0_i32 : i32, i32
  }
  func.func @transform_2(%arg0: i32) -> (i32, i32) {
    %c0_i32 = arith.constant 0 : i32
    %c0_i32_0 = arith.constant 0 : i32
    return %arg0, %c0_i32 : i32, i32
  }
  func.func @transform_3(%arg0: i32) -> (i32, i32) {
    %c0_i32 = arith.constant 0 : i32
    %c0_i32_0 = arith.constant 0 : i32
    return %arg0, %c0_i32 : i32, i32
  }
  func.func @transform_4(%arg0: i32) -> (i32, i32) {
    %c0_i32 = arith.constant 0 : i32
    %c0_i32_0 = arith.constant 0 : i32
    %c0_i32_1 = arith.constant 0 : i32
    return %c0_i32, %c0_i32_0 : i32, i32
  }
  func.func @transform_5(%arg0: i32) -> (i32, i32) {
    %c0_i32 = arith.constant 0 : i32
    %c0_i32_0 = arith.constant 0 : i32
    %c0_i32_1 = arith.constant 0 : i32
    return %c0_i32, %c0_i32_0 : i32, i32
  }
  func.func @transform_6(%arg0: i32) -> (i32, i32) {
    %c0_i32 = arith.constant 0 : i32
    %c0_i32_0 = arith.constant 0 : i32
    %c0_i32_1 = arith.constant 0 : i32
    return %c0_i32, %c0_i32_0 : i32, i32
  }
  func.func @transform_7(%arg0: i32) -> (i32, i32) {
    %c0_i32 = arith.constant 0 : i32
    %c0_i32_0 = arith.constant 0 : i32
    %c0_i32_1 = arith.constant 0 : i32
    return %c0_i32, %c0_i32_0 : i32, i32
  }
  func.func @transform_8(%arg0: i32) -> (i32, i32) {
    %c0_i32 = arith.constant 0 : i32
    %c0_i32_0 = arith.constant 0 : i32
    %c0_i32_1 = arith.constant 0 : i32
    return %c0_i32, %c0_i32_0 : i32, i32
  }
  func.func @transform_9(%arg0: i32) -> (i32, i32) {
    %c0_i32 = arith.constant 0 : i32
    %c0_i32_0 = arith.constant 0 : i32
    %c0_i32_1 = arith.constant 0 : i32
    return %c0_i32, %c0_i32_0 : i32, i32
  }
  func.func @transform_10(%arg0: i32) -> (i32, i32) {
    %c0_i32 = arith.constant 0 : i32
    %c0_i32_0 = arith.constant 0 : i32
    %c0_i32_1 = arith.constant 0 : i32
    return %c0_i32, %c0_i32_0 : i32, i32
  }
  func.func @transform_11(%arg0: i32) -> (i32, i32) {
    %c0_i32 = arith.constant 0 : i32
    %c0_i32_0 = arith.constant 0 : i32
    %c0_i32_1 = arith.constant 0 : i32
    return %c0_i32, %c0_i32_0 : i32, i32
  }
  func.func @transform_12(%arg0: i32) -> (i32, i32) {
    %c0_i32 = arith.constant 0 : i32
    %c0_i32_0 = arith.constant 0 : i32
    %c0_i32_1 = arith.constant 0 : i32
    return %c0_i32, %c0_i32_0 : i32, i32
  }
  func.func @transform_13(%arg0: i32) -> (i32, i32) {
    %c0_i32 = arith.constant 0 : i32
    %c0_i32_0 = arith.constant 0 : i32
    %c0_i32_1 = arith.constant 0 : i32
    return %c0_i32, %c0_i32_0 : i32, i32
  }
  func.func @transform_14(%arg0: i32) -> (i32, i32) {
    %c0_i32 = arith.constant 0 : i32
    %c0_i32_0 = arith.constant 0 : i32
    return %arg0, %c0_i32 : i32, i32
  }
  func.func @transform_15(%arg0: i32) -> (i32, i32) {
    %c0_i32 = arith.constant 0 : i32
    %c0_i32_0 = arith.constant 0 : i32
    return %arg0, %c0_i32 : i32, i32
  }
}

</mosaic_0001>

<llo_original>
// kernel: tpu_custom_call.1
$region0: #{tpu_custom_call.1}
  #allocation0 [shape = 'u32[]', space=smem, size = 0x4, offset = 0x4, fixed_abs, tag = 'smem constant byte address 0x4 - core index']
  #allocation1 [shape = 'u32[144,128]{1,0:T(1,128)}', space=vmem, size = 0x12000, scoped, tag = 'internal scratch']
  %s0 = inlined_call_operand.hbm [shape: f32[16,16], index: 0, kind: input, shape index: {}]
  %s1 = inlined_call_operand.hbm [shape: f32[16,16], index: 1, kind: input, shape index: {}]
  %s2 = inlined_call_operand.hbm [shape: f32[16,16], index: 2, kind: input, shape index: {}]
  %s3 = inlined_call_operand.hbm [shape: f32[16,16], index: 3, kind: input, shape index: {}]
  %s4 = inlined_call_operand.hbm [shape: f32[16,32], index: 4, kind: input, shape index: {}]
  %s5 = inlined_call_operand.vmem [shape: f32[1,32], index: 5, kind: input, shape index: {}]
  %s6 = inlined_call_operand.hbm [shape: f32[16,32], index: 6, kind: input, shape index: {}]
  %s7 = inlined_call_operand.vmem [shape: f32[1,32], index: 7, kind: input, shape index: {}]
  %s8 = inlined_call_operand.hbm [shape: f32[32,32], index: 8, kind: input, shape index: {}]
  %s9 = inlined_call_operand.vmem [shape: f32[32,32], index: 9, kind: input, shape index: {}]
  %s10 = inlined_call_operand.vmem [shape: f32[1,32], index: 10, kind: input, shape index: {}]
  %s11 = inlined_call_operand.hbm [shape: f32[32,128], index: 11, kind: input, shape index: {}]
  %s12 = inlined_call_operand.hbm [shape: f32[32,128], index: 12, kind: input, shape index: {}]
  %s13 = inlined_call_operand.vmem [shape: f32[1,128], index: 13, kind: input, shape index: {}]
  %s14 = inlined_call_operand.hbm [shape: f32[16,32], index: 14, kind: output, shape index: {0}]
  %s15 = inlined_call_operand.hbm [shape: f32[16,128], index: 15, kind: output, shape index: {1}]
  %16 = xla_tuple %s14, %s15
  %s17 = sld [smem:[#allocation0]]
  $region110: #{tpu_custom_call.1} parent=0
    _
  %s19 = ssub.s32 1, %s17
  %s20 = scalar_select 0, %s19, %s17
  $region1: #{tpu_custom_call.1} parent=0
    #allocation2 [shape = 'u8[8192]{0}', space=vmem, size = 0x2000, scoped, tag = 'input window, operand 0, single buffered']
    #allocation3 [shape = 's32[1]{0}', space=sflag, size = 0x4, scoped, tag = 'scoped memory for tpu_custom_call.1']
    #allocation4 [shape = 's32[1]{0}', space=sflag, size = 0x4, scoped, tag = 'scoped memory for tpu_custom_call.1']
    #allocation5 [shape = 'u8[8192]{0}', space=vmem, size = 0x2000, scoped, tag = 'input window, operand 1, single buffered']
    #allocation6 [shape = 's32[1]{0}', space=sflag, size = 0x4, scoped, tag = 'scoped memory for tpu_custom_call.1']
    #allocation7 [shape = 'u8[8192]{0}', space=vmem, size = 0x2000, scoped, tag = 'input window, operand 2, single buffered']
    #allocation8 [shape = 'u8[8192]{0}', space=vmem, size = 0x2000, scoped, tag = 'input window, operand 3, single buffered']
    #allocation9 [shape = 's32[1]{0}', space=sflag, size = 0x4, scoped, tag = 'scoped memory for tpu_custom_call.1']
    #allocation10 [shape = 'u8[8192]{0}', space=vmem, size = 0x2000, scoped, tag = 'input window, operand 4, single buffered']
    #allocation11 [shape = 'u8[8192]{0}', space=vmem, size = 0x2000, scoped, tag = 'input window, operand 6, single buffered']
    #allocation12 [shape = 's32[1]{0}', space=sflag, size = 0x4, scoped, tag = 'scoped memory for tpu_custom_call.1']
    #allocation13 [shape = 'u8[16384]{0}', space=vmem, size = 0x4000, scoped, tag = 'input window, operand 8, single buffered']
    #allocation14 [shape = 'u8[16384]{0}', space=vmem, size = 0x4000, scoped, tag = 'input window, operand 11, single buffered']
    #allocation15 [shape = 's32[1]{0}', space=sflag, size = 0x4, scoped, tag = 'scoped memory for tpu_custom_call.1']
    #allocation16 [shape = 'u8[16384]{0}', space=vmem, size = 0x4000, scoped, tag = 'input window, operand 12, single buffered']
    #allocation17 [shape = 'u8[8192]{0}', space=vmem, size = 0x2000, scoped, tag = 'output window, operand 0, single buffered']
    #allocation18 [shape = 'u8[8192]{0}', space=vmem, size = 0x2000, scoped, tag = 'output window, operand 1, single buffered']
    #allocation19 [shape = 's32[1]{0}', space=sflag, size = 0x4, scoped, tag = 'scoped memory for tpu_custom_call.1']
    %21 = vsyncpa [#allocation3], 0
    %22 = vsyncpa [#allocation6], 0
    %23 = vsyncpa [#allocation9], 0
    %24 = vsyncpa [#allocation12], 0
    %25 = vsyncpa [#allocation15], 0
    %26 = vsyncpa [#allocation4], 0
    %27 = vsyncpa [#allocation19], 0
    // Predicated region
    $region2: #{tpu_custom_call.1} parent=1 // pred_check
      _
    $region3: #{tpu_custom_call.1} parent=1 // pred_check_branch
      %29 = sbr.rel (0) target = $region5
    $region4: #{tpu_custom_call.1} parent=1 // pred_region
      %s31 = ssub.s32 256, 256
      %32 = vsyncadd [#allocation3], %s31
      %s33 = sshll.u32 [#allocation2], 4
      %s34 = int_to_ptr.vmem [resolvable:$true] %s33
      %39 = dma.hbm_to_vmem [thread:$0]  %s0, 256, %s34, [#allocation3], 128, 128, 8
    $region5: #{tpu_custom_call.1} parent=1 // pred_fallthru
      _
    // Predicated region
    $region6: #{tpu_custom_call.1} parent=1 // pred_check
      _
    $region7: #{tpu_custom_call.1} parent=1 // pred_check_branch
      %41 = sbr.rel (0) target = $region9
    $region8: #{tpu_custom_call.1} parent=1 // pred_region
      %s43 = ssub.s32 256, 256
      %44 = vsyncadd [#allocation6], %s43
      %s45 = sshll.u32 [#allocation5], 4
      %s46 = int_to_ptr.vmem [resolvable:$true] %s45
      %51 = dma.hbm_to_vmem [thread:$0]  %s1, 256, %s46, [#allocation6], 128, 128, 8
    $region9: #{tpu_custom_call.1} parent=1 // pred_fallthru
      _
    // Predicated region
    $region10: #{tpu_custom_call.1} parent=1 // pred_check
      _
    $region11: #{tpu_custom_call.1} parent=1 // pred_check_branch
      %53 = sbr.rel (0) target = $region13
    $region12: #{tpu_custom_call.1} parent=1 // pred_region
      %s55 = ssub.s32 256, 256
      %56 = vsyncadd [#allocation6], %s55
      %s57 = sshll.u32 [#allocation7], 4
      %s58 = int_to_ptr.vmem [resolvable:$true] %s57
      %63 = dma.hbm_to_vmem [thread:$0]  %s2, 256, %s58, [#allocation6], 128, 128, 8
    $region13: #{tpu_custom_call.1} parent=1 // pred_fallthru
      _
    // Predicated region
    $region14: #{tpu_custom_call.1} parent=1 // pred_check
      _
    $region15: #{tpu_custom_call.1} parent=1 // pred_check_branch
      %65 = sbr.rel (0) target = $region17
    $region16: #{tpu_custom_call.1} parent=1 // pred_region
      %s67 = ssub.s32 256, 256
      %68 = vsyncadd [#allocation9], %s67
      %s69 = sshll.u32 [#allocation8], 4
      %s70 = int_to_ptr.vmem [resolvable:$true] %s69
      %75 = dma.hbm_to_vmem [thread:$0]  %s3, 256, %s70, [#allocation9], 128, 128, 8
    $region17: #{tpu_custom_call.1} parent=1 // pred_fallthru
      _
    // Predicated region
    $region18: #{tpu_custom_call.1} parent=1 // pred_check
      _
    $region19: #{tpu_custom_call.1} parent=1 // pred_check_branch
      %77 = sbr.rel (0) target = $region21
    $region20: #{tpu_custom_call.1} parent=1 // pred_region
      %s79 = ssub.s32 256, 256
      %80 = vsyncadd [#allocation9], %s79
      %s81 = sshll.u32 [#allocation10], 4
      %s82 = int_to_ptr.vmem [resolvable:$true] %s81
      %87 = dma.hbm_to_vmem [thread:$0]  %s4, 256, %s82, [#allocation9], 128, 128, 8
    $region21: #{tpu_custom_call.1} parent=1 // pred_fallthru
      _
    // Predicated region
    $region22: #{tpu_custom_call.1} parent=1 // pred_check
      _
    $region23: #{tpu_custom_call.1} parent=1 // pred_check_branch
      %89 = sbr.rel (0) target = $region25
    $region24: #{tpu_custom_call.1} parent=1 // pred_region
      _
    $region25: #{tpu_custom_call.1} parent=1 // pred_fallthru
      _
    // Predicated region
    $region26: #{tpu_custom_call.1} parent=1 // pred_check
      _
    $region27: #{tpu_custom_call.1} parent=1 // pred_check_branch
      %91 = sbr.rel (0) target = $region29
    $region28: #{tpu_custom_call.1} parent=1 // pred_region
      %s93 = ssub.s32 256, 256
      %94 = vsyncadd [#allocation12], %s93
      %s95 = sshll.u32 [#allocation11], 4
      %s96 = int_to_ptr.vmem [resolvable:$true] %s95
      %101 = dma.hbm_to_vmem [thread:$0]  %s6, 256, %s96, [#allocation12], 128, 128, 8
    $region29: #{tpu_custom_call.1} parent=1 // pred_fallthru
      _
    // Predicated region
    $region30: #{tpu_custom_call.1} parent=1 // pred_check
      _
    $region31: #{tpu_custom_call.1} parent=1 // pred_check_branch
      %103 = sbr.rel (0) target = $region33
    $region32: #{tpu_custom_call.1} parent=1 // pred_region
      _
    $region33: #{tpu_custom_call.1} parent=1 // pred_fallthru
      _
    // Predicated region
    $region34: #{tpu_custom_call.1} parent=1 // pred_check
      _
    $region35: #{tpu_custom_call.1} parent=1 // pred_check_branch
      %105 = sbr.rel (0) target = $region37
    $region36: #{tpu_custom_call.1} parent=1 // pred_region
      %s107 = ssub.s32 512, 512
      %108 = vsyncadd [#allocation12], %s107
      %s109 = sshll.u32 [#allocation13], 4
      %s110 = int_to_ptr.vmem [resolvable:$true] %s109
      %115 = dma.hbm_to_vmem [thread:$0]  %s8, 512, %s110, [#allocation12], 128, 128, 8
    $region37: #{tpu_custom_call.1} parent=1 // pred_fallthru
      _
    // Predicated region
    $region38: #{tpu_custom_call.1} parent=1 // pred_check
      _
    $region39: #{tpu_custom_call.1} parent=1 // pred_check_branch
      %117 = sbr.rel (0) target = $region41
    $region40: #{tpu_custom_call.1} parent=1 // pred_region
      _
    $region41: #{tpu_custom_call.1} parent=1 // pred_fallthru
      _
    // Predicated region
    $region42: #{tpu_custom_call.1} parent=1 // pred_check
      _
    $region43: #{tpu_custom_call.1} parent=1 // pred_check_branch
      %119 = sbr.rel (0) target = $region45
    $region44: #{tpu_custom_call.1} parent=1 // pred_region
      _
    $region45: #{tpu_custom_call.1} parent=1 // pred_fallthru
      _
    // Predicated region
    $region46: #{tpu_custom_call.1} parent=1 // pred_check
      _
    $region47: #{tpu_custom_call.1} parent=1 // pred_check_branch
      %121 = sbr.rel (0) target = $region49
    $region48: #{tpu_custom_call.1} parent=1 // pred_region
      %s123 = ssub.s32 512, 512
      %124 = vsyncadd [#allocation15], %s123
      %s125 = sshll.u32 [#allocation14], 4
      %s126 = int_to_ptr.vmem [resolvable:$true] %s125
      %131 = dma.hbm_to_vmem [thread:$0]  %s11, 512, %s126, [#allocation15], 128, 128, 8
    $region49: #{tpu_custom_call.1} parent=1 // pred_fallthru
      _
    // Predicated region
    $region50: #{tpu_custom_call.1} parent=1 // pred_check
      _
    $region51: #{tpu_custom_call.1} parent=1 // pred_check_branch
      %133 = sbr.rel (0) target = $region53
    $region52: #{tpu_custom_call.1} parent=1 // pred_region
      %s135 = ssub.s32 512, 512
      %136 = vsyncadd [#allocation15], %s135
      %s137 = sshll.u32 [#allocation16], 4
      %s138 = int_to_ptr.vmem [resolvable:$true] %s137
      %143 = dma.hbm_to_vmem [thread:$0]  %s12, 512, %s138, [#allocation15], 128, 128, 8
    $region53: #{tpu_custom_call.1} parent=1 // pred_fallthru
      _
    // Predicated region
    $region54: #{tpu_custom_call.1} parent=1 // pred_check
      _
    $region55: #{tpu_custom_call.1} parent=1 // pred_check_branch
      %145 = sbr.rel (0) target = $region57
    $region56: #{tpu_custom_call.1} parent=1 // pred_region
      _
    $region57: #{tpu_custom_call.1} parent=1 // pred_fallthru
      _
    // Predicated region
    $region58: #{tpu_custom_call.1} parent=1 // pred_check
      _
    $region59: #{tpu_custom_call.1} parent=1 // pred_check_branch
      %147 = sbr.rel (0) target = $region61
    $region60: #{tpu_custom_call.1} parent=1 // pred_region
      %148 = dma.done [#allocation3], 256
    $region61: #{tpu_custom_call.1} parent=1 // pred_fallthru
      _
    // Predicated region
    $region62: #{tpu_custom_call.1} parent=1 // pred_check
      _
    $region63: #{tpu_custom_call.1} parent=1 // pred_check_branch
      %150 = sbr.rel (0) target = $region65
    $region64: #{tpu_custom_call.1} parent=1 // pred_region
      %151 = dma.done [#allocation6], 256
    $region65: #{tpu_custom_call.1} parent=1 // pred_fallthru
      _
    // Predicated region
    $region66: #{tpu_custom_call.1} parent=1 // pred_check
      _
    $region67: #{tpu_custom_call.1} parent=1 // pred_check_branch
      %153 = sbr.rel (0) target = $region69
    $region68: #{tpu_custom_call.1} parent=1 // pred_region
      %154 = dma.done [#allocation6], 256
    $region69: #{tpu_custom_call.1} parent=1 // pred_fallthru
      _
    // Predicated region
    $region70: #{tpu_custom_call.1} parent=1 // pred_check
      _
    $region71: #{tpu_custom_call.1} parent=1 // pred_check_branch
      %156 = sbr.rel (0) target = $region73
    $region72: #{tpu_custom_call.1} parent=1 // pred_region
      %157 = dma.done [#allocation9], 256
    $region73: #{tpu_custom_call.1} parent=1 // pred_fallthru
      _
    // Predicated region
    $region74: #{tpu_custom_call.1} parent=1 // pred_check
      _
    $region75: #{tpu_custom_call.1} parent=1 // pred_check_branch
      %159 = sbr.rel (0) target = $region77
    $region76: #{tpu_custom_call.1} parent=1 // pred_region
      %160 = dma.done [#allocation9], 256
    $region77: #{tpu_custom_call.1} parent=1 // pred_fallthru
      _
    // Predicated region
    $region78: #{tpu_custom_call.1} parent=1 // pred_check
      _
    $region79: #{tpu_custom_call.1} parent=1 // pred_check_branch
      %162 = sbr.rel (0) target = $region81
    $region80: #{tpu_custom_call.1} parent=1 // pred_region
      %163 = dma.done [#allocation12], 256
    $region81: #{tpu_custom_call.1} parent=1 // pred_fallthru
      _
    // Predicated region
    $region82: #{tpu_custom_call.1} parent=1 // pred_check
      _
    $region83: #{tpu_custom_call.1} parent=1 // pred_check_branch
      %165 = sbr.rel (0) target = $region85
    $region84: #{tpu_custom_call.1} parent=1 // pred_region
      %166 = dma.done [#allocation12], 512
    $region85: #{tpu_custom_call.1} parent=1 // pred_fallthru
      _
    // Predicated region
    $region86: #{tpu_custom_call.1} parent=1 // pred_check
      _
    $region87: #{tpu_custom_call.1} parent=1 // pred_check_branch
      %168 = sbr.rel (0) target = $region89
    $region88: #{tpu_custom_call.1} parent=1 // pred_region
      %169 = dma.done [#allocation15], 512
    $region89: #{tpu_custom_call.1} parent=1 // pred_fallthru
      _
    // Predicated region
    $region90: #{tpu_custom_call.1} parent=1 // pred_check
      _
    $region91: #{tpu_custom_call.1} parent=1 // pred_check_branch
      %171 = sbr.rel (0) target = $region93
    $region92: #{tpu_custom_call.1} parent=1 // pred_region
      %172 = dma.done [#allocation15], 512
    $region93: #{tpu_custom_call.1} parent=1 // pred_fallthru
      _
    %v173 = vld [vmem:[#allocation2] sm:$0xff]
    %v174 = vld [vmem:[#allocation2 + $0x8] sm:$0xff]
    %v175 = vld [vmem:[#allocation10] sm:$0xff]
    %v176 = vld [vmem:[#allocation10 + $0x8] sm:$0xff]
    %v177 = vld [vmem:[%s5] sm:$0x1]
    %v179 = vlaneseq
    %v180 = vshrl.u32 %v179, 7
    %v181 = vsub.s32 0, %v180
    %v182 = vrot.slane %v177, %v181
    %vm184 = vcmask 130048
    %v186 = vsel %vm184, %v173, 0
    %v189 = vsel %vm184, %v174, 0
    %191 = vmatprep.subr.mxu0 0.0
    %192 = vmatpush1.msra.mxu0 %v175
    %193 = vmatprep.subr.mxu0 0.0
    %194 = vmatpush1.msra.mxu0 %v176
    %195 = vmatprep.subr.mxu0 0.0
    %196 = vmatpush1.msra.mxu0 0.0
    %197 = vmatprep.subr.mxu0 0.0
    %198 = vmatpush1.msra.mxu0 0.0
    %199 = vmatprep.subr.mxu0 0.0
    %200 = vmatpush1.msra.mxu0 0.0
    %201 = vmatprep.subr.mxu0 0.0
    %202 = vmatpush1.msra.mxu0 0.0
    %203 = vmatprep.subr.mxu0 0.0
    %204 = vmatpush1.msra.mxu0 0.0
    %205 = vmatprep.subr.mxu0 0.0
    %206 = vmatpush1.msra.mxu0 0.0
    %207 = vmatprep.subr.mxu0 0.0
    %208 = vmatpush1.msra.mxu0 0.0
    %209 = vmatprep.subr.mxu0 0.0
    %210 = vmatpush1.msra.mxu0 0.0
    %211 = vmatprep.subr.mxu0 0.0
    %212 = vmatpush1.msra.mxu0 0.0
    %213 = vmatprep.subr.mxu0 0.0
    %214 = vmatpush1.msra.mxu0 0.0
    %215 = vmatprep.subr.mxu0 0.0
    %216 = vmatpush1.msra.mxu0 0.0
    %217 = vmatprep.subr.mxu0 0.0
    %218 = vmatpush1.msra.mxu0 0.0
    %219 = vmatprep.subr.mxu0 0.0
    %220 = vmatpush1.msra.mxu0 0.0
    %221 = vmatprep.subr.mxu0 0.0
    %222 = vmatpush1.msra.mxu0 0.0
    %223 = vmatprep.subr.mxu0 0.0
    %224 = vmatpush1.msra.mxu0 0.0
    %225 = vmatprep.subr.mxu0 0.0
    %226 = vmatpush1.msra.mxu0 0.0
    %227 = vmatprep.subr.mxu0 0.0
    %228 = vmatpush1.msra.mxu0 0.0
    %229 = vmatprep.subr.mxu0 0.0
    %230 = vmatpush1.msra.mxu0 0.0
    %231 = vmatprep.subr.mxu0 0.0
    %232 = vmatpush1.msra.mxu0 0.0
    %233 = vmatprep.subr.mxu0 0.0
    %234 = vmatpush1.msra.mxu0 0.0
    %235 = vmatprep.subr.mxu0 0.0
    %236 = vmatpush1.msra.mxu0 0.0
    %237 = vmatprep.subr.mxu0 0.0
    %238 = vmatpush1.msra.mxu0 0.0
    %239 = vmatprep.subr.mxu0 0.0
    %240 = vmatpush1.msra.mxu0 0.0
    %241 = vmatprep.subr.mxu0 0.0
    %242 = vmatpush1.msra.mxu0 0.0
    %243 = vmatprep.subr.mxu0 0.0
    %244 = vmatpush1.msra.mxu0 0.0
    %245 = vmatprep.subr.mxu0 0.0
    %246 = vmatpush1.msra.mxu0 0.0
    %247 = vmatprep.subr.mxu0 0.0
    %248 = vmatpush1.msra.mxu0 0.0
    %249 = vmatprep.subr.mxu0 0.0
    %250 = vmatpush1.msra.mxu0 0.0
    %251 = vmatprep.subr.mxu0 0.0
    %252 = vmatpush1.msra.mxu0 0.0
    %253 = vmatprep.subr.mxu0 0.0
    %254 = vmatpush1.msra.mxu0 0.0
    %255 = vmatprep.mubr.f32.mxu0 0.0
    %256 = vmatmul.mubr.f32.gmra.mrb[0].mxu0 %v186
    %v257 = vpop.f32.mrb[0].mxu0
    %v258 = vadd.f32 %v182, %v257
    %v259 = vpop.f32.mrb[0].mxu0
    %260 = vmatprep.mubr.f32.mxu0 0.0
    %261 = vmatmul.mubr.f32.gmra.mrb[0].mxu0 %v189
    %v262 = vpop.f32.mrb[0].mxu0
    %v263 = vadd.f32 %v182, %v262
    %v264 = vpop.f32.mrb[0].mxu0
    %265 = vdwg.mxu0
    %v266 = vld [vmem:[#allocation5] sm:$0xff]
    %v267 = vld [vmem:[#allocation5 + $0x8] sm:$0xff]
    %v268 = vld [vmem:[#allocation11] sm:$0xff]
    %v269 = vld [vmem:[#allocation11 + $0x8] sm:$0xff]
    %v270 = vld [vmem:[%s7] sm:$0x1]
    %v272 = vlaneseq
    %v273 = vshrl.u32 %v272, 7
    %v274 = vsub.s32 0, %v273
    %v275 = vrot.slane %v270, %v274
    %v278 = vsel %vm184, %v266, 0
    %v281 = vsel %vm184, %v267, 0
    %283 = vmatprep.subr.mxu0 0.0
    %284 = vmatpush1.msra.mxu0 %v268
    %285 = vmatprep.subr.mxu0 0.0
    %286 = vmatpush1.msra.mxu0 %v269
    %287 = vmatprep.subr.mxu0 0.0
    %288 = vmatpush1.msra.mxu0 0.0
    %289 = vmatprep.subr.mxu0 0.0
    %290 = vmatpush1.msra.mxu0 0.0
    %291 = vmatprep.subr.mxu0 0.0
    %292 = vmatpush1.msra.mxu0 0.0
    %293 = vmatprep.subr.mxu0 0.0
    %294 = vmatpush1.msra.mxu0 0.0
    %295 = vmatprep.subr.mxu0 0.0
    %296 = vmatpush1.msra.mxu0 0.0
    %297 = vmatprep.subr.mxu0 0.0
    %298 = vmatpush1.msra.mxu0 0.0
    %299 = vmatprep.subr.mxu0 0.0
    %300 = vmatpush1.msra.mxu0 0.0
    %301 = vmatprep.subr.mxu0 0.0
    %302 = vmatpush1.msra.mxu0 0.0
    %303 = vmatprep.subr.mxu0 0.0
    %304 = vmatpush1.msra.mxu0 0.0
    %305 = vmatprep.subr.mxu0 0.0
    %306 = vmatpush1.msra.mxu0 0.0
    %307 = vmatprep.subr.mxu0 0.0
    %308 = vmatpush1.msra.mxu0 0.0
    %309 = vmatprep.subr.mxu0 0.0
    %310 = vmatpush1.msra.mxu0 0.0
    %311 = vmatprep.subr.mxu0 0.0
    %312 = vmatpush1.msra.mxu0 0.0
    %313 = vmatprep.subr.mxu0 0.0
    %314 = vmatpush1.msra.mxu0 0.0
    %315 = vmatprep.subr.mxu0 0.0
    %316 = vmatpush1.msra.mxu0 0.0
    %317 = vmatprep.subr.mxu0 0.0
    %318 = vmatpush1.msra.mxu0 0.0
    %319 = vmatprep.subr.mxu0 0.0
    %320 = vmatpush1.msra.mxu0 0.0
    %321 = vmatprep.subr.mxu0 0.0
    %322 = vmatpush1.msra.mxu0 0.0
    %323 = vmatprep.subr.mxu0 0.0
    %324 = vmatpush1.msra.mxu0 0.0
    %325 = vmatprep.subr.mxu0 0.0
    %326 = vmatpush1.msra.mxu0 0.0
    %327 = vmatprep.subr.mxu0 0.0
    %328 = vmatpush1.msra.mxu0 0.0
    %329 = vmatprep.subr.mxu0 0.0
    %330 = vmatpush1.msra.mxu0 0.0
    %331 = vmatprep.subr.mxu0 0.0
    %332 = vmatpush1.msra.mxu0 0.0
    %333 = vmatprep.subr.mxu0 0.0
    %334 = vmatpush1.msra.mxu0 0.0
    %335 = vmatprep.subr.mxu0 0.0
    %336 = vmatpush1.msra.mxu0 0.0
    %337 = vmatprep.subr.mxu0 0.0
    %338 = vmatpush1.msra.mxu0 0.0
    %339 = vmatprep.subr.mxu0 0.0
    %340 = vmatpush1.msra.mxu0 0.0
    %341 = vmatprep.subr.mxu0 0.0
    %342 = vmatpush1.msra.mxu0 0.0
    %343 = vmatprep.subr.mxu0 0.0
    %344 = vmatpush1.msra.mxu0 0.0
    %345 = vmatprep.subr.mxu0 0.0
    %346 = vmatpush1.msra.mxu0 0.0
    %347 = vmatprep.mubr.f32.mxu0 0.0
    %348 = vmatmul.mubr.f32.gmra.mrb[0].mxu0 %v278
    %v349 = vpop.f32.mrb[0].mxu0
    %v350 = vadd.f32 %v275, %v349
    %v351 = vpop.f32.mrb[0].mxu0
    %352 = vmatprep.mubr.f32.mxu0 0.0
    %353 = vmatmul.mubr.f32.gmra.mrb[0].mxu0 %v281
    %v354 = vpop.f32.mrb[0].mxu0
    %v355 = vadd.f32 %v275, %v354
    %v356 = vpop.f32.mrb[0].mxu0
    %357 = vdwg.mxu0
    %v358 = vld [vmem:[#allocation7] sm:$0xff]
    %v359 = vld [vmem:[#allocation7 + $0x8] sm:$0xff]
    %v360 = vld [vmem:[#allocation8] sm:$0xff]
    %v361 = vld [vmem:[#allocation8 + $0x8] sm:$0xff]
    %v362 = vmul.f32 %v358, %v360
    %v363 = vmul.f32 %v359, %v361
    %v364 = vsel %vm184, %v362, 0.0
    %365 = vadd.xlane.f32.xlu0 %v364
    %v366 = vpop.xlane.xlu0 %365
    %v367 = vsel %vm184, %v363, 0.0
    %368 = vadd.xlane.f32.xlu0 %v367
    %v369 = vpop.xlane.xlu0 %368
    %v370 = vmul.f32 %v358, %v358
    %v371 = vmul.f32 %v359, %v359
    %v372 = vsel %vm184, %v370, 0.0
    %373 = vadd.xlane.f32.xlu0 %v372
    %v374 = vpop.xlane.xlu0 %373
    %v375 = vsel %vm184, %v371, 0.0
    %376 = vadd.xlane.f32.xlu0 %v375
    %v377 = vpop.xlane.xlu0 %376
    %v378 = vrsqrt.pop %v374
    %v379 = vmul.f32 %v374, %v378
    %vm380 = vcmp.eq.f32.partialorder %v374, inf
    %v381 = vsel %vm380, %v374, %v379
    %vm382 = vcmp.eq.f32.partialorder %v374, 0.0
    %v383 = vand.u32 %v374, 2147483648
    %v384 = vsel %vm382, %v383, %v381
    %v385 = vrsqrt.pop %v377
    %v386 = vmul.f32 %v377, %v385
    %vm387 = vcmp.eq.f32.partialorder %v377, inf
    %v388 = vsel %vm387, %v377, %v386
    %vm389 = vcmp.eq.f32.partialorder %v377, 0.0
    %v390 = vand.u32 %v377, 2147483648
    %v391 = vsel %vm389, %v390, %v388
    %v392 = vmax.f32 %v384, 1e-08
    %v393 = vmax.f32 %v391, 1e-08
    %v394 = vmul.f32 %v360, %v360
    %v395 = vmul.f32 %v361, %v361
    %v396 = vsel %vm184, %v394, 0.0
    %397 = vadd.xlane.f32.xlu0 %v396
    %v398 = vpop.xlane.xlu0 %397
    %v399 = vsel %vm184, %v395, 0.0
    %400 = vadd.xlane.f32.xlu0 %v399
    %v401 = vpop.xlane.xlu0 %400
    %v402 = vrsqrt.pop %v398
    %v403 = vmul.f32 %v398, %v402
    %vm404 = vcmp.eq.f32.partialorder %v398, inf
    %v405 = vsel %vm404, %v398, %v403
    %vm406 = vcmp.eq.f32.partialorder %v398, 0.0
    %v407 = vand.u32 %v398, 2147483648
    %v408 = vsel %vm406, %v407, %v405
    %v409 = vrsqrt.pop %v401
    %v410 = vmul.f32 %v401, %v409
    %vm411 = vcmp.eq.f32.partialorder %v401, inf
    %v412 = vsel %vm411, %v401, %v410
    %vm413 = vcmp.eq.f32.partialorder %v401, 0.0
    %v414 = vand.u32 %v401, 2147483648
    %v415 = vsel %vm413, %v414, %v412
    %v416 = vmax.f32 %v408, 1e-08
    %v417 = vmax.f32 %v415, 1e-08
    %v418 = vmul.f32 %v392, %v416
    %v419 = vmul.f32 %v393, %v417
    %v420 = vrcp.pop %v418
    %v421 = vmul.f32 %v366, %v420
    %v422 = vrcp.pop %v419
    %v423 = vmul.f32 %v369, %v422
    %v424 = vmul.f32 %v258, %v421
    %v425 = vmul.f32 %v263, %v423
    %v426 = vld [vmem:[#allocation13] sm:$0xff]
    %v427 = vld [vmem:[#allocation13 + $0x8] sm:$0xff]
    %v428 = vld [vmem:[#allocation13 + $0x10] sm:$0xff]
    %v429 = vld [vmem:[#allocation13 + $0x18] sm:$0xff]
    %v430 = vld [vmem:[%s9] sm:$0xff]
    %v431 = vld [vmem:[%s9 + $0x8] sm:$0xff]
    %v432 = vld [vmem:[%s9 + $0x10] sm:$0xff]
    %v433 = vld [vmem:[%s9 + $0x18] sm:$0xff]
    %vm434 = vcmask 261120
    %v436 = vsel %vm434, %v350, 0
    %v439 = vsel %vm434, %v355, 0
    %441 = vmatprep.subr.mxu0 0.0
    %442 = vmatpush1.msra.mxu0 %v430
    %443 = vmatprep.subr.mxu0 0.0
    %444 = vmatpush1.msra.mxu0 %v431
    %445 = vmatprep.subr.mxu0 0.0
    %446 = vmatpush1.msra.mxu0 %v432
    %447 = vmatprep.subr.mxu0 0.0
    %448 = vmatpush1.msra.mxu0 %v433
    %449 = vmatprep.subr.mxu0 0.0
    %450 = vmatpush1.msra.mxu0 0.0
    %451 = vmatprep.subr.mxu0 0.0
    %452 = vmatpush1.msra.mxu0 0.0
    %453 = vmatprep.subr.mxu0 0.0
    %454 = vmatpush1.msra.mxu0 0.0
    %455 = vmatprep.subr.mxu0 0.0
    %456 = vmatpush1.msra.mxu0 0.0
    %457 = vmatprep.subr.mxu0 0.0
    %458 = vmatpush1.msra.mxu0 0.0
    %459 = vmatprep.subr.mxu0 0.0
    %460 = vmatpush1.msra.mxu0 0.0
    %461 = vmatprep.subr.mxu0 0.0
    %462 = vmatpush1.msra.mxu0 0.0
    %463 = vmatprep.subr.mxu0 0.0
    %464 = vmatpush1.msra.mxu0 0.0
    %465 = vmatprep.subr.mxu0 0.0
    %466 = vmatpush1.msra.mxu0 0.0
    %467 = vmatprep.subr.mxu0 0.0
    %468 = vmatpush1.msra.mxu0 0.0
    %469 = vmatprep.subr.mxu0 0.0
    %470 = vmatpush1.msra.mxu0 0.0
    %471 = vmatprep.subr.mxu0 0.0
    %472 = vmatpush1.msra.mxu0 0.0
    %473 = vmatprep.subr.mxu0 0.0
    %474 = vmatpush1.msra.mxu0 0.0
    %475 = vmatprep.subr.mxu0 0.0
    %476 = vmatpush1.msra.mxu0 0.0
    %477 = vmatprep.subr.mxu0 0.0
    %478 = vmatpush1.msra.mxu0 0.0
    %479 = vmatprep.subr.mxu0 0.0
    %480 = vmatpush1.msra.mxu0 0.0
    %481 = vmatprep.subr.mxu0 0.0
    %482 = vmatpush1.msra.mxu0 0.0
    %483 = vmatprep.subr.mxu0 0.0
    %484 = vmatpush1.msra.mxu0 0.0
    %485 = vmatprep.subr.mxu0 0.0
    %486 = vmatpush1.msra.mxu0 0.0
    %487 = vmatprep.subr.mxu0 0.0
    %488 = vmatpush1.msra.mxu0 0.0
    %489 = vmatprep.subr.mxu0 0.0
    %490 = vmatpush1.msra.mxu0 0.0
    %491 = vmatprep.subr.mxu0 0.0
    %492 = vmatpush1.msra.mxu0 0.0
    %493 = vmatprep.subr.mxu0 0.0
    %494 = vmatpush1.msra.mxu0 0.0
    %495 = vmatprep.subr.mxu0 0.0
    %496 = vmatpush1.msra.mxu0 0.0
    %497 = vmatprep.subr.mxu0 0.0
    %498 = vmatpush1.msra.mxu0 0.0
    %499 = vmatprep.subr.mxu0 0.0
    %500 = vmatpush1.msra.mxu0 0.0
    %501 = vmatprep.subr.mxu0 0.0
    %502 = vmatpush1.msra.mxu0 0.0
    %503 = vmatprep.subr.mxu0 0.0
    %504 = vmatpush1.msra.mxu0 0.0
    %505 = vmatprep.mubr.f32.mxu0 0.0
    %506 = vmatmul.mubr.f32.gmra.mrb[0].mxu0 %v436
    %v507 = vpop.f32.mrb[0].mxu0
    %v508 = vadd.f32 0.0, %v507
    %v509 = vpop.f32.mrb[0].mxu0
    %510 = vmatprep.mubr.f32.mxu0 0.0
    %511 = vmatmul.mubr.f32.gmra.mrb[0].mxu0 %v439
    %v512 = vpop.f32.mrb[0].mxu0
    %v513 = vadd.f32 0.0, %v512
    %v514 = vpop.f32.mrb[0].mxu0
    %515 = vdwg.mxu0
    %v517 = vsel %vm434, %v424, 0
    %v520 = vsel %vm434, %v425, 0
    %522 = vmatprep.subr.mxu0 0.0
    %523 = vmatpush1.msra.mxu0 %v426
    %524 = vmatprep.subr.mxu0 0.0
    %525 = vmatpush1.msra.mxu0 %v427
    %526 = vmatprep.subr.mxu0 0.0
    %527 = vmatpush1.msra.mxu0 %v428
    %528 = vmatprep.subr.mxu0 0.0
    %529 = vmatpush1.msra.mxu0 %v429
    %530 = vmatprep.subr.mxu0 0.0
    %531 = vmatpush1.msra.mxu0 0.0
    %532 = vmatprep.subr.mxu0 0.0
    %533 = vmatpush1.msra.mxu0 0.0
    %534 = vmatprep.subr.mxu0 0.0
    %535 = vmatpush1.msra.mxu0 0.0
    %536 = vmatprep.subr.mxu0 0.0
    %537 = vmatpush1.msra.mxu0 0.0
    %538 = vmatprep.subr.mxu0 0.0
    %539 = vmatpush1.msra.mxu0 0.0
    %540 = vmatprep.subr.mxu0 0.0
    %541 = vmatpush1.msra.mxu0 0.0
    %542 = vmatprep.subr.mxu0 0.0
    %543 = vmatpush1.msra.mxu0 0.0
    %544 = vmatprep.subr.mxu0 0.0
    %545 = vmatpush1.msra.mxu0 0.0
    %546 = vmatprep.subr.mxu0 0.0
    %547 = vmatpush1.msra.mxu0 0.0
    %548 = vmatprep.subr.mxu0 0.0
    %549 = vmatpush1.msra.mxu0 0.0
    %550 = vmatprep.subr.mxu0 0.0
    %551 = vmatpush1.msra.mxu0 0.0
    %552 = vmatprep.subr.mxu0 0.0
    %553 = vmatpush1.msra.mxu0 0.0
    %554 = vmatprep.subr.mxu0 0.0
    %555 = vmatpush1.msra.mxu0 0.0
    %556 = vmatprep.subr.mxu0 0.0
    %557 = vmatpush1.msra.mxu0 0.0
    %558 = vmatprep.subr.mxu0 0.0
    %559 = vmatpush1.msra.mxu0 0.0
    %560 = vmatprep.subr.mxu0 0.0
    %561 = vmatpush1.msra.mxu0 0.0
    %562 = vmatprep.subr.mxu0 0.0
    %563 = vmatpush1.msra.mxu0 0.0
    %564 = vmatprep.subr.mxu0 0.0
    %565 = vmatpush1.msra.mxu0 0.0
    %566 = vmatprep.subr.mxu0 0.0
    %567 = vmatpush1.msra.mxu0 0.0
    %568 = vmatprep.subr.mxu0 0.0
    %569 = vmatpush1.msra.mxu0 0.0
    %570 = vmatprep.subr.mxu0 0.0
    %571 = vmatpush1.msra.mxu0 0.0
    %572 = vmatprep.subr.mxu0 0.0
    %573 = vmatpush1.msra.mxu0 0.0
    %574 = vmatprep.subr.mxu0 0.0
    %575 = vmatpush1.msra.mxu0 0.0
    %576 = vmatprep.subr.mxu0 0.0
    %577 = vmatpush1.msra.mxu0 0.0
    %578 = vmatprep.subr.mxu0 0.0
    %579 = vmatpush1.msra.mxu0 0.0
    %580 = vmatprep.subr.mxu0 0.0
    %581 = vmatpush1.msra.mxu0 0.0
    %582 = vmatprep.subr.mxu0 0.0
    %583 = vmatpush1.msra.mxu0 0.0
    %584 = vmatprep.subr.mxu0 0.0
    %585 = vmatpush1.msra.mxu0 0.0
    %586 = vmatprep.mubr.f32.mxu0 0.0
    %587 = vmatmul.mubr.f32.gmra.mrb[0].mxu0 %v517
    %v588 = vpop.f32.mrb[0].mxu0
    %v589 = vadd.f32 %v508, %v588
    %v590 = vpop.f32.mrb[0].mxu0
    %591 = vmatprep.mubr.f32.mxu0 0.0
    %592 = vmatmul.mubr.f32.gmra.mrb[0].mxu0 %v520
    %v593 = vpop.f32.mrb[0].mxu0
    %v594 = vadd.f32 %v513, %v593
    %v595 = vpop.f32.mrb[0].mxu0
    %596 = vdwg.mxu0
    %v597 = vld [vmem:[%s10] sm:$0x1]
    %v599 = vlaneseq
    %v600 = vshrl.u32 %v599, 7
    %v601 = vsub.s32 0, %v600
    %v602 = vrot.slane %v597, %v601
    %v604 = vadd.f32 %v589, %v602
    %v605 = vadd.f32 %v594, %v602
    %v606 = vmax.f32 %v604, 0.0
    %v607 = vmax.f32 %v605, 0.0
    %608 = vst.msk [vmem:[#allocation17] sm:$0xff] %vm434, %v606
    %609 = vst.msk [vmem:[#allocation17 + $0x8] sm:$0xff] %vm434, %v607
    %v610 = vld [vmem:[#allocation14] sm:$0xff]
    %v611 = vld [vmem:[#allocation14 + $0x8] sm:$0xff]
    %v612 = vld [vmem:[#allocation14 + $0x10] sm:$0xff]
    %v613 = vld [vmem:[#allocation14 + $0x18] sm:$0xff]
    %v614 = vld [vmem:[#allocation16] sm:$0xff]
    %v615 = vld [vmem:[#allocation16 + $0x8] sm:$0xff]
    %v616 = vld [vmem:[#allocation16 + $0x10] sm:$0xff]
    %v617 = vld [vmem:[#allocation16 + $0x18] sm:$0xff]
    %618 = vmatprep.subr.mxu0 0.0
    %619 = vmatpush1.msra.mxu0 %v614
    %620 = vmatprep.subr.mxu0 0.0
    %621 = vmatpush1.msra.mxu0 %v615
    %622 = vmatprep.subr.mxu0 0.0
    %623 = vmatpush1.msra.mxu0 %v616
    %624 = vmatprep.subr.mxu0 0.0
    %625 = vmatpush1.msra.mxu0 %v617
    %626 = vmatprep.subr.mxu0 0.0
    %627 = vmatpush1.msra.mxu0 0.0
    %628 = vmatprep.subr.mxu0 0.0
    %629 = vmatpush1.msra.mxu0 0.0
    %630 = vmatprep.subr.mxu0 0.0
    %631 = vmatpush1.msra.mxu0 0.0
    %632 = vmatprep.subr.mxu0 0.0
    %633 = vmatpush1.msra.mxu0 0.0
    %634 = vmatprep.subr.mxu0 0.0
    %635 = vmatpush1.msra.mxu0 0.0
    %636 = vmatprep.subr.mxu0 0.0
    %637 = vmatpush1.msra.mxu0 0.0
    %638 = vmatprep.subr.mxu0 0.0
    %639 = vmatpush1.msra.mxu0 0.0
    %640 = vmatprep.subr.mxu0 0.0
    %641 = vmatpush1.msra.mxu0 0.0
    %642 = vmatprep.subr.mxu0 0.0
    %643 = vmatpush1.msra.mxu0 0.0
    %644 = vmatprep.subr.mxu0 0.0
    %645 = vmatpush1.msra.mxu0 0.0
    %646 = vmatprep.subr.mxu0 0.0
    %647 = vmatpush1.msra.mxu0 0.0
    %648 = vmatprep.subr.mxu0 0.0
    %649 = vmatpush1.msra.mxu0 0.0
    %650 = vmatprep.subr.mxu0 0.0
    %651 = vmatpush1.msra.mxu0 0.0
    %652 = vmatprep.subr.mxu0 0.0
    %653 = vmatpush1.msra.mxu0 0.0
    %654 = vmatprep.subr.mxu0 0.0
    %655 = vmatpush1.msra.mxu0 0.0
    %656 = vmatprep.subr.mxu0 0.0
    %657 = vmatpush1.msra.mxu0 0.0
    %658 = vmatprep.subr.mxu0 0.0
    %659 = vmatpush1.msra.mxu0 0.0
    %660 = vmatprep.subr.mxu0 0.0
    %661 = vmatpush1.msra.mxu0 0.0
    %662 = vmatprep.subr.mxu0 0.0
    %663 = vmatpush1.msra.mxu0 0.0
    %664 = vmatprep.subr.mxu0 0.0
    %665 = vmatpush1.msra.mxu0 0.0
    %666 = vmatprep.subr.mxu0 0.0
    %667 = vmatpush1.msra.mxu0 0.0
    %668 = vmatprep.subr.mxu0 0.0
    %669 = vmatpush1.msra.mxu0 0.0
    %670 = vmatprep.subr.mxu0 0.0
    %671 = vmatpush1.msra.mxu0 0.0
    %672 = vmatprep.subr.mxu0 0.0
    %673 = vmatpush1.msra.mxu0 0.0
    %674 = vmatprep.subr.mxu0 0.0
    %675 = vmatpush1.msra.mxu0 0.0
    %676 = vmatprep.subr.mxu0 0.0
    %677 = vmatpush1.msra.mxu0 0.0
    %678 = vmatprep.subr.mxu0 0.0
    %679 = vmatpush1.msra.mxu0 0.0
    %680 = vmatprep.subr.mxu0 0.0
    %681 = vmatpush1.msra.mxu0 0.0
    %682 = vmatprep.mubr.f32.mxu0 0.0
    %683 = vmatmul.mubr.f32.gmra.mrb[0].mxu0 %v436
    %v684 = vpop.f32.mrb[0].mxu0
    %v685 = vadd.f32 0.0, %v684
    %v686 = vpop.f32.mrb[0].mxu0
    %687 = vmatprep.mubr.f32.mxu0 0.0
    %688 = vmatmul.mubr.f32.gmra.mrb[0].mxu0 %v439
    %v689 = vpop.f32.mrb[0].mxu0
    %v690 = vadd.f32 0.0, %v689
    %v691 = vpop.f32.mrb[0].mxu0
    %692 = vdwg.mxu0
    %693 = vmatprep.subr.mxu0 0.0
    %694 = vmatpush1.msra.mxu0 %v610
    %695 = vmatprep.subr.mxu0 0.0
    %696 = vmatpush1.msra.mxu0 %v611
    %697 = vmatprep.subr.mxu0 0.0
    %698 = vmatpush1.msra.mxu0 %v612
    %699 = vmatprep.subr.mxu0 0.0
    %700 = vmatpush1.msra.mxu0 %v613
    %701 = vmatprep.subr.mxu0 0.0
    %702 = vmatpush1.msra.mxu0 0.0
    %703 = vmatprep.subr.mxu0 0.0
    %704 = vmatpush1.msra.mxu0 0.0
    %705 = vmatprep.subr.mxu0 0.0
    %706 = vmatpush1.msra.mxu0 0.0
    %707 = vmatprep.subr.mxu0 0.0
    %708 = vmatpush1.msra.mxu0 0.0
    %709 = vmatprep.subr.mxu0 0.0
    %710 = vmatpush1.msra.mxu0 0.0
    %711 = vmatprep.subr.mxu0 0.0
    %712 = vmatpush1.msra.mxu0 0.0
    %713 = vmatprep.subr.mxu0 0.0
    %714 = vmatpush1.msra.mxu0 0.0
    %715 = vmatprep.subr.mxu0 0.0
    %716 = vmatpush1.msra.mxu0 0.0
    %717 = vmatprep.subr.mxu0 0.0
    %718 = vmatpush1.msra.mxu0 0.0
    %719 = vmatprep.subr.mxu0 0.0
    %720 = vmatpush1.msra.mxu0 0.0
    %721 = vmatprep.subr.mxu0 0.0
    %722 = vmatpush1.msra.mxu0 0.0
    %723 = vmatprep.subr.mxu0 0.0
    %724 = vmatpush1.msra.mxu0 0.0
    %725 = vmatprep.subr.mxu0 0.0
    %726 = vmatpush1.msra.mxu0 0.0
    %727 = vmatprep.subr.mxu0 0.0
    %728 = vmatpush1.msra.mxu0 0.0
    %729 = vmatprep.subr.mxu0 0.0
    %730 = vmatpush1.msra.mxu0 0.0
    %731 = vmatprep.subr.mxu0 0.0
    %732 = vmatpush1.msra.mxu0 0.0
    %733 = vmatprep.subr.mxu0 0.0
    %734 = vmatpush1.msra.mxu0 0.0
    %735 = vmatprep.subr.mxu0 0.0
    %736 = vmatpush1.msra.mxu0 0.0
    %737 = vmatprep.subr.mxu0 0.0
    %738 = vmatpush1.msra.mxu0 0.0
    %739 = vmatprep.subr.mxu0 0.0
    %740 = vmatpush1.msra.mxu0 0.0
    %741 = vmatprep.subr.mxu0 0.0
    %742 = vmatpush1.msra.mxu0 0.0
    %743 = vmatprep.subr.mxu0 0.0
    %744 = vmatpush1.msra.mxu0 0.0
    %745 = vmatprep.subr.mxu0 0.0
    %746 = vmatpush1.msra.mxu0 0.0
    %747 = vmatprep.subr.mxu0 0.0
    %748 = vmatpush1.msra.mxu0 0.0
    %749 = vmatprep.subr.mxu0 0.0
    %750 = vmatpush1.msra.mxu0 0.0
    %751 = vmatprep.subr.mxu0 0.0
    %752 = vmatpush1.msra.mxu0 0.0
    %753 = vmatprep.subr.mxu0 0.0
    %754 = vmatpush1.msra.mxu0 0.0
    %755 = vmatprep.subr.mxu0 0.0
    %756 = vmatpush1.msra.mxu0 0.0
    %757 = vmatprep.mubr.f32.mxu0 0.0
    %758 = vmatmul.mubr.f32.gmra.mrb[0].mxu0 %v517
    %v759 = vpop.f32.mrb[0].mxu0
    %v760 = vadd.f32 %v685, %v759
    %v761 = vpop.f32.mrb[0].mxu0
    %762 = vmatprep.mubr.f32.mxu0 0.0
    %763 = vmatmul.mubr.f32.gmra.mrb[0].mxu0 %v520
    %v764 = vpop.f32.mrb[0].mxu0
    %v765 = vadd.f32 %v690, %v764
    %v766 = vpop.f32.mrb[0].mxu0
    %767 = vdwg.mxu0
    %v768 = vld [vmem:[%s13] sm:$0x1]
    %v770 = vlaneseq
    %v771 = vshrl.u32 %v770, 7
    %v772 = vsub.s32 0, %v771
    %v773 = vrot.slane %v768, %v772
    %v775 = vadd.f32 %v760, %v773
    %v776 = vadd.f32 %v765, %v773
    %777 = vst [vmem:[#allocation18] sm:$0xff] %v775
    %778 = vst [vmem:[#allocation18 + $0x8] sm:$0xff] %v776
    // Predicated region
    $region94: #{tpu_custom_call.1} parent=1 // pred_check
      _
    $region95: #{tpu_custom_call.1} parent=1 // pred_check_branch
      %780 = sbr.rel (0) target = $region97
    $region96: #{tpu_custom_call.1} parent=1 // pred_region
      %s782 = ssub.s32 256, 256
      %783 = vsyncadd [#allocation4], %s782
      %s784 = sshll.u32 [#allocation17], 4
      %s785 = int_to_ptr.vmem [resolvable:$true] %s784
      %790 = dma.vmem_to_hbm [thread:$0]  %s785, 256, %s14, [#allocation4], 128, 128, 8
    $region97: #{tpu_custom_call.1} parent=1 // pred_fallthru
      _
    // Predicated region
    $region98: #{tpu_custom_call.1} parent=1 // pred_check
      _
    $region99: #{tpu_custom_call.1} parent=1 // pred_check_branch
      %792 = sbr.rel (0) target = $region101
    $region100: #{tpu_custom_call.1} parent=1 // pred_region
      %s794 = ssub.s32 256, 256
      %795 = vsyncadd [#allocation19], %s794
      %s796 = sshll.u32 [#allocation18], 4
      %s797 = int_to_ptr.vmem [resolvable:$true] %s796
      %802 = dma.vmem_to_hbm [thread:$0]  %s797, 256, %s15, [#allocation19], 128, 128, 8
    $region101: #{tpu_custom_call.1} parent=1 // pred_fallthru
      _
    // Predicated region
    $region102: #{tpu_custom_call.1} parent=1 // pred_check
      _
    $region103: #{tpu_custom_call.1} parent=1 // pred_check_branch
      %804 = sbr.rel (0) target = $region105
    $region104: #{tpu_custom_call.1} parent=1 // pred_region
      %805 = dma.done [#allocation4], 256
    $region105: #{tpu_custom_call.1} parent=1 // pred_fallthru
      _
    // Predicated region
    $region106: #{tpu_custom_call.1} parent=1 // pred_check
      _
    $region107: #{tpu_custom_call.1} parent=1 // pred_check_branch
      %807 = sbr.rel (0) target = $region109
    $region108: #{tpu_custom_call.1} parent=1 // pred_region
      %808 = dma.done [#allocation19], 256
    $region109: #{tpu_custom_call.1} parent=1 // pred_fallthru
      _
    %809 = vsyncpa [#allocation3], 1
    %810 = vsyncpa [#allocation6], 1
    %811 = vsyncpa [#allocation9], 1
    %812 = vsyncpa [#allocation12], 1
    %813 = vsyncpa [#allocation15], 1
    %814 = vsyncpa [#allocation4], 1
    %815 = vsyncpa [#allocation19], 1

</llo_original>
